<compile_context>
chip_gen: v6e
topology: v6e:2x2x1
jax: 0.10.0
libtpu: 0.0.40
codegen_flags: <defaults>
</compile_context>

<pallas_src>
import functools

import jax
import jax.numpy as jnp
from jax import lax
from jax.experimental import pallas as pl
from jax.experimental.pallas import tpu as pltpu

_EPS = 1e-12                      # matches torch.nn.functional.normalize eps


def _round_up(x, m):
    return ((x + m - 1) // m) * m


def _vmem_limit_bytes():
    """Scoped-VMEM limit from the chip's physical VMEM (v7x: 64 MiB -> 48 MiB
    limit; v5e/v6e: 128 MiB -> 96 MiB limit), leaving headroom for internals."""
    phys = 64 * 1024 * 1024                           # conservative default
    try:
        info = pltpu.get_tpu_info()
        phys = int(getattr(info, "vmem_capacity_bytes", phys))
    except Exception:
        pass
    return min((phys * 3) // 4, 100 * 1024 * 1024)


def _choose_prop_tiling(n, f_total, vmem_limit):
    """Pick (tm, tk, h_resident) for the A_hat @ h propagation.

    Prefers the largest row tile (amortizes h re-streaming + per-step
    overhead), then a fully VMEM-resident h, then the largest k tile, under a
    double-buffered VMEM budget of ~0.8 * vmem_limit."""
    n128 = _round_up(n, 128)
    budget = int(vmem_limit * 0.8)
    cands = [t for t in (2048, 1024, 512, 256, 128) if t <= n128] or [128]
    for ctm in cands:                               # largest row tile first
        o_b = ctm * f_total * 4 * 2                 # f32 out tile, 2 buffers
        for resident in (True, False):              # prefer h resident
            for ctk in cands:                       # largest k tile first
                a_b = ctm * ctk * 2 * 2             # bf16 A tile, 2 buffers
                if resident:
                    h_b = _round_up(n, ctk) * f_total * 2 * 2
                else:
                    h_b = ctk * f_total * 2 * 2
                if a_b + o_b + h_b <= budget:
                    return ctm, ctk, resident
    return 128, 128, False


# ----------------------------------------------------------------------------
# Pallas kernels
# ----------------------------------------------------------------------------
def _make_vgae_packed_kernel(f_out):
    """Both branches in one 128-lane slab:
         cols [0, f_out)        -> linear1(x)                    (no norm)
         cols [f_out, 2*f_out)  -> L2-normalize(linear2(x)) * 0.4
         cols [2*f_out, 128)    -> 0 (zero-padded W / b)."""
    def kernel(x_ref, w_ref, b_ref, h_ref):
        h = jnp.dot(x_ref[...], w_ref[...],
                    preferred_element_type=jnp.float32) + b_ref[...]
        col = lax.broadcasted_iota(jnp.int32, h.shape, 1)
        m2 = jnp.logical_and(col >= f_out, col < 2 * f_out)
        h2 = jnp.where(m2, h, 0.0)
        ss = jnp.sum(h2 * h2, axis=1, keepdims=True)
        scale = lax.rsqrt(jnp.maximum(ss, _EPS * _EPS)) * 0.4
        h_ref[...] = jnp.where(m2, h * scale, h).astype(h_ref.dtype)
    return kernel


def _make_vgae_wide_kernel(f_pad):
    """2*f_out > 128: two f_pad-wide halves, two lane-aligned direct stores."""
    def kernel(x_ref, w_ref, b_ref, h_ref):
        h = jnp.dot(x_ref[...], w_ref[...],
                    preferred_element_type=jnp.float32) + b_ref[...]
        h1 = h[:, :f_pad]
        h2 = h[:, f_pad:]
        ss = jnp.sum(h2 * h2, axis=1, keepdims=True)
        scale = lax.rsqrt(jnp.maximum(ss, _EPS * _EPS)) * 0.4
        h_ref[:, :f_pad] = h1.astype(h_ref.dtype)
        h_ref[:, f_pad:] = (h2 * scale).astype(h_ref.dtype)
    return kernel


def _gae_feat_kernel(x_ref, w_ref, b_ref, h_ref):
    """h = L2-normalize(x @ W1t + b1) * 1.8 (padded columns are zero)."""
    h = jnp.dot(x_ref[...], w_ref[...],
                preferred_element_type=jnp.float32) + b_ref[...]
    ss = jnp.sum(h * h, axis=1, keepdims=True)
    h_ref[...] = (h * (lax.rsqrt(jnp.maximum(ss, _EPS * _EPS)) * 1.8)
                  ).astype(h_ref.dtype)


def _make_prop_kernel(h_resident, tk):
    """One k-slice of A_hat @ h; f32 accumulation directly into o_ref."""
    def kernel(a_ref, h_ref, o_ref):
        k = pl.program_id(1)
        if h_resident:
            start = pl.multiple_of(k * tk, tk)
            h_blk = h_ref[pl.ds(start, tk), :]
        else:
            h_blk = h_ref[...]
        part = jnp.dot(a_ref[...], h_blk, preferred_element_type=jnp.float32)

        @pl.when(k == 0)
        def _first():
            o_ref[...] = part

        @pl.when(k > 0)
        def _rest():
            o_ref[...] += part
    return kernel


# ----------------------------------------------------------------------------
# pallas_call wrappers
# ----------------------------------------------------------------------------
def _feature_transform(kernel, x_bf16, w_bf16, b_f32, f_total, tm_feat,
                       vmem_limit):
    n_rows, f_in = x_bf16.shape
    return pl.pallas_call(
        kernel,
        out_shape=jax.ShapeDtypeStruct((n_rows, f_total), jnp.bfloat16),
        grid_spec=pltpu.PrefetchScalarGridSpec(
            num_scalar_prefetch=0,
            grid=(n_rows // tm_feat,),
            in_specs=[pl.BlockSpec((tm_feat, f_in), lambda i: (i, 0)),
                      pl.BlockSpec((f_in, f_total), lambda i: (0, 0)),
                      pl.BlockSpec((1, f_total), lambda i: (0, 0))],
            out_specs=pl.BlockSpec((tm_feat, f_total), lambda i: (i, 0)),
        ),
        compiler_params=pltpu.CompilerParams(
            dimension_semantics=("parallel",),
            vmem_limit_bytes=vmem_limit),
    )(x_bf16, w_bf16, b_f32)


def _propagate(a_bf16, h_bf16, tm, tk, h_resident, vmem_limit):
    n_rows_pad, n_cols_pad = a_bf16.shape
    f_total = h_bf16.shape[1]
    if h_resident:
        # Whole-array block, constant index_map -> h is DMA'd once and never
        # re-streamed across the grid.
        h_spec = pl.BlockSpec((n_cols_pad, f_total), lambda i, k: (0, 0))
    else:
        h_spec = pl.BlockSpec((tk, f_total), lambda i, k: (k, 0))
    return pl.pallas_call(
        _make_prop_kernel(h_resident, tk),
        out_shape=jax.ShapeDtypeStruct((n_rows_pad, f_total), jnp.float32),
        grid_spec=pltpu.PrefetchScalarGridSpec(
            num_scalar_prefetch=0,
            grid=(n_rows_pad // tm, n_cols_pad // tk),
            in_specs=[pl.BlockSpec((tm, tk), lambda i, k: (i, k)),
                      h_spec],
            out_specs=pl.BlockSpec((tm, f_total), lambda i, k: (i, 0)),
        ),
        # TODO(synk): on v7x, confirm the row axis shards across both
        #             TensorCores; if one TC idles, switch it to
        #             pltpu.CORE_PARALLEL / explicit core_map split.
        compiler_params=pltpu.CompilerParams(
            dimension_semantics=("parallel", "arbitrary"),
            vmem_limit_bytes=vmem_limit),
    )(a_bf16, h_bf16)


# ----------------------------------------------------------------------------
# Glue: GCN normalization (scatter into PADDED dense A_hat), init, dispatch
# ----------------------------------------------------------------------------
def build_gcn_adj_padded(edge_index, num_nodes, n_rows_pad, n_cols_pad):
    """Dense D^{-1/2}(A + I)D^{-1/2} (PyG gcn_norm, add_self_loops=True,
    flow='source_to_target'), scattered directly into the padded buffer.
    Padded rows/columns stay exactly zero (only indices < num_nodes are
    written), which is what makes the non-zero padded rows of h harmless."""
    row = edge_index[0]
    col = edge_index[1]
    loop = jnp.arange(num_nodes, dtype=edge_index.dtype)
    row = jnp.concatenate([row, loop])
    col = jnp.concatenate([col, loop])
    ew = jnp.ones(row.shape[0], dtype=jnp.float32)
    # NOTE: duplicate edges are summed (matches PyG's scatter-add gcn_norm).
    deg = jnp.zeros((num_nodes,), jnp.float32).at[col].add(ew)
    dis = jnp.where(deg > 0, lax.rsqrt(deg), 0.0)
    w = dis[row] * ew * dis[col]
    # out[dst] += w * x[src]  ->  A_hat[dst, src]
    return jnp.zeros((n_rows_pad, n_cols_pad), jnp.float32).at[col, row].add(w)


def init_params(key, in_channels, out_channels):
    """Deterministic init mimicking nn.Linear's uniform(-1/sqrt(fan_in), ...)."""
    k1, k2, k3, k4 = jax.random.split(key, 4)
    bound = 1.0 / jnp.sqrt(jnp.float32(in_channels))
    w1t = jax.random.uniform(k1, (in_channels, out_channels), jnp.float32, -bound, bound)
    b1 = jax.random.uniform(k2, (1, out_channels), jnp.float32, -bound, bound)
    w2t = jax.random.uniform(k3, (in_channels, out_channels), jnp.float32, -bound, bound)
    b2 = jax.random.uniform(k4, (1, out_channels), jnp.float32, -bound, bound)
    return w1t, b1, w2t, b2


@functools.partial(jax.jit, static_argnames=("model",))
def vgnae_encoder_forward(x, edge_index, params, model="VGAE"):
    n, f_in = x.shape
    w1t, b1, w2t, b2 = params
    f_out = w1t.shape[1]
    vmem_limit = _vmem_limit_bytes()

    # --- pack the linear branch(es) into one lane-dense weight slab ---------
    if model == "VGAE" and 2 * f_out <= 128:
        f_total = 128
        pad = f_total - 2 * f_out
        wcat = jnp.concatenate([w1t, w2t, jnp.zeros((f_in, pad), jnp.float32)], axis=1)
        bcat = jnp.concatenate([b1, b2, jnp.zeros((1, pad), jnp.float32)], axis=1)
        feat_kernel = _make_vgae_packed_kernel(f_out)
        mu_lo = f_out
    elif model == "VGAE":
        f_pad = _round_up(f_out, 128)
        f_total = 2 * f_pad

        def padc(a):
            return jnp.pad(a, ((0, 0), (0, f_pad - f_out)))

        wcat = jnp.concatenate([padc(w1t), padc(w2t)], axis=1)
        bcat = jnp.concatenate([padc(b1), padc(b2)], axis=1)
        feat_kernel = _make_vgae_wide_kernel(f_pad)
        mu_lo = f_pad
    elif model == "GAE":
        f_total = _round_up(f_out, 128)
        wcat = jnp.pad(w1t, ((0, 0), (0, f_total - f_out)))
        bcat = jnp.pad(b1, ((0, 0), (0, f_total - f_out)))
        feat_kernel = _gae_feat_kernel
        mu_lo = 0
    else:
        return x  # matches the PyTorch fall-through

    # --- generation-aware tiling; decoupled row (tm) vs column (tk) padding -
    tm, tk, h_resident = _choose_prop_tiling(n, f_total, vmem_limit)
    n_rows_pad = _round_up(n, tm)
    n_cols_pad = _round_up(n, tk)
    tm_feat = tk if tk <= 512 else 512            # divides n_cols_pad

    # --- adjacency: scatter straight into the padded buffer, cast once ------
    a_bf16 = build_gcn_adj_padded(edge_index, n, n_rows_pad, n_cols_pad
                                  ).astype(jnp.bfloat16)

    # --- feature transform: bf16 operands, f32 accumulation + norm ----------
    x_pad = jnp.pad(x, ((0, n_cols_pad - n), (0, 0))).astype(jnp.bfloat16)
    h = _feature_transform(feat_kernel, x_pad, wcat.astype(jnp.bfloat16),
                           bcat, f_total, tm_feat, vmem_limit)

    # --- one A_hat pass propagates both branches (APPNP K=1, alpha=0) -------
    out = _propagate(a_bf16, h, tm, tk, h_resident, vmem_limit)

    if model == "GAE":
        return out[:n, :f_out]
    x_ = out[:n, :f_out]                       # propagate(linear1(x))
    mu = out[:n, mu_lo:mu_lo + f_out]          # propagate(norm(linear2(x))*0.4)
    return mu, x_


# ----------------------------------------------------------------------------
# References (plain JAX, f32) for sanity checks
# ----------------------------------------------------------------------------
def _reference_vgae(x, edge_index, params):
    w1t, b1, w2t, b2 = params
    n = x.shape[0]
    a = build_gcn_adj_padded(edge_index, n, n, n)
    x_ = a @ (x @ w1t + b1)
    h = x @ w2t + b2
    h = h / jnp.maximum(jnp.linalg.norm(h, axis=1, keepdims=True), _EPS) * 0.4
    return a @ h, x_


def _reference_gae(x, edge_index, params):
    w1t, b1, _, _ = params
    n = x.shape[0]
    a = build_gcn_adj_padded(edge_index, n, n, n)
    h = x @ w1t + b1
    h = h / jnp.maximum(jnp.linalg.norm(h, axis=1, keepdims=True), _EPS) * 1.8
    return a @ h


if __name__ == "__main__":
    N = 16            # number of graph nodes
    IN_CH = 32        # in_channels
    OUT_CH = 16       # out_channels

    key = jax.random.PRNGKey(0)
    kx, ke, kp = jax.random.split(key, 3)

    x = jax.random.normal(kx, (N, IN_CH), jnp.float32)

    # random directed edges, plus reversed copies to make the graph symmetric
    E = 24
    src = jax.random.randint(ke, (E,), 0, N, dtype=jnp.int32)
    dst = jax.random.randint(jax.random.fold_in(ke, 1), (E,), 0, N, dtype=jnp.int32)
    edge_index = jnp.stack(
        [jnp.concatenate([src, dst]), jnp.concatenate([dst, src])], axis=0
    )

    params = init_params(kp, IN_CH, OUT_CH)

    # VGAE branch
    mu, x_ = vgnae_encoder_forward(x, edge_index, params, model="VGAE")
    jax.block_until_ready((mu, x_))
    mu_ref, xr_ref = _reference_vgae(x, edge_index, params)
    assert mu.shape == (N, OUT_CH) and x_.shape == (N, OUT_CH)
    # x / W / A_hat / h hit the MXU in bf16 -> tolerance reflects bf16 mantissa
    assert jnp.allclose(mu, mu_ref, atol=5e-2, rtol=5e-2)
    assert jnp.allclose(x_, xr_ref, atol=5e-2, rtol=5e-2)

    # GAE branch
    gae_out = vgnae_encoder_forward(x, edge_index, params, model="GAE")
    jax.block_until_ready(gae_out)
    gae_ref = _reference_gae(x, edge_index, params)
    assert gae_out.shape == (N, OUT_CH)
    assert jnp.allclose(gae_out, gae_ref, atol=5e-2, rtol=5e-2)

    print("KERNEL_OK")
</pallas_src>

<mosaic_0001>
module attributes {stable_mosaic.version = 11 : i64} {
  func.func private @main(%arg0: i32) attributes {dimension_semantics = [#tpu.dimension_semantics<core_parallel>], iteration_bounds = array<i64: 2>, tpu.core_type = #tpu.core_type<sc_scalar_subcore>, window_params = []} {
    return
  }
}

module attributes {stable_mosaic.version = 11 : i64} {
  func.func private @main(%arg0: i32) attributes {dimension_semantics = [#tpu.dimension_semantics<core_parallel>], iteration_bounds = array<i64: 2>, tpu.core_type = #tpu.core_type<sc_scalar_subcore>, window_params = []} {
    return
  }
}

module attributes {stable_mosaic.version = 11 : i64} {
  func.func @kernel(%arg0: i32, %arg1: memref<128x32xbf16, #tpu.memory_space<vmem>>, %arg2: memref<32x128xbf16, #tpu.memory_space<vmem>>, %arg3: memref<1x128xf32, #tpu.memory_space<vmem>>, %arg4: memref<128x128xbf16, #tpu.memory_space<vmem>>) attributes {dimension_semantics = [#tpu.dimension_semantics<parallel>], iteration_bounds = array<i64: 1>, scalar_prefetch = 0 : i64, scratch_operands = 0 : i64, tpu.core_type = #tpu.core_type<tc>, window_params = [{transform_indices = @transform_0, window_bounds = array<i64: 128, 32>}, {pipeline_mode = #tpu.pipeline_mode<synchronous>, transform_indices = @transform_1, window_bounds = array<i64: 32, 128>}, {pipeline_mode = #tpu.pipeline_mode<synchronous>, transform_indices = @transform_2, window_bounds = array<i64: 1, 128>}, {transform_indices = @transform_3, window_bounds = array<i64: 128, 128>}]} {
    %c0 = arith.constant 0 : index
    %c0_0 = arith.constant 0 : index
    %0 = vector.load %arg1[%c0, %c0_0] : memref<128x32xbf16, #tpu.memory_space<vmem>>, vector<128x32xbf16>
    %c0_1 = arith.constant 0 : index
    %c0_2 = arith.constant 0 : index
    %1 = vector.load %arg2[%c0_1, %c0_2] : memref<32x128xbf16, #tpu.memory_space<vmem>>, vector<32x128xbf16>
    %cst = arith.constant dense<0.000000e+00> : vector<128x128xf32>
    %2 = tpu.matmul %0, %1, %cst {dimension_numbers = #tpu.dot_dimension_numbers<[1], [0], [0], [1], [0, 0, 1, 1], [], []>} : vector<128x32xbf16>, vector<32x128xbf16>, vector<128x128xf32> -> vector<128x128xf32>
    %c0_3 = arith.constant 0 : index
    %c0_4 = arith.constant 0 : index
    %3 = vector.load %arg3[%c0_3, %c0_4] : memref<1x128xf32, #tpu.memory_space<vmem>>, vector<1x128xf32>
    %4 = vector.broadcast %3 : vector<1x128xf32> to vector<128x128xf32>
    %5 = arith.addf %2, %4 : vector<128x128xf32>
    %6 = tpu.iota {dimensions = array<i32: 1>} : vector<128x128xi32>
    %c16_i32 = arith.constant 16 : i32
    %7 = vector.broadcast %c16_i32 : i32 to vector<128x128xi32>
    %8 = arith.cmpi sge, %6, %7 : vector<128x128xi32>
    %c32_i32 = arith.constant 32 : i32
    %9 = vector.broadcast %c32_i32 : i32 to vector<128x128xi32>
    %10 = arith.cmpi slt, %6, %9 : vector<128x128xi32>
    %11 = arith.andi %8, %10 : vector<128x128xi1>
    %cst_5 = arith.constant 0.000000e+00 : f32
    %12 = vector.broadcast %cst_5 : f32 to vector<128x128xf32>
    %13 = arith.select %11, %5, %12 : vector<128x128xi1>, vector<128x128xf32>
    %14 = arith.mulf %13, %13 : vector<128x128xf32>
    %cst_6 = arith.constant dense<0.000000e+00> : vector<128xf32>
    %15 = vector.multi_reduction <add>, %14, %cst_6 [1] : vector<128x128xf32> to vector<128xf32>
    %16 = vector.shape_cast %15 : vector<128xf32> to vector<128x1xf32>
    %cst_7 = arith.constant 1.000000e-24 : f32
    %17 = vector.broadcast %cst_7 : f32 to vector<128x1xf32>
    %18 = arith.maximumf %16, %17 : vector<128x1xf32>
    %19 = math.rsqrt %18 : vector<128x1xf32>
    %cst_8 = arith.constant 4.000000e-01 : f32
    %20 = vector.broadcast %cst_8 : f32 to vector<128x1xf32>
    %21 = arith.mulf %19, %20 : vector<128x1xf32>
    %22 = vector.broadcast %21 : vector<128x1xf32> to vector<128x128xf32>
    %23 = arith.mulf %5, %22 : vector<128x128xf32>
    %24 = arith.select %11, %23, %5 : vector<128x128xi1>, vector<128x128xf32>
    %25 = arith.truncf %24 : vector<128x128xf32> to vector<128x128xbf16>
    %c0_9 = arith.constant 0 : index
    %c0_10 = arith.constant 0 : index
    %26 = vector.load %arg4[%c0_9, %c0_10] : memref<128x128xbf16, #tpu.memory_space<vmem>>, vector<128x128xbf16>
    tpu.vector_store %arg4[%c0_9, %c0_10], %25 {strides = array<i32>} : memref<128x128xbf16, #tpu.memory_space<vmem>>, vector<128x128xbf16>,
    return
  }
  func.func @transform_0(%arg0: i32) -> (i32, i32) {
    %c0_i32 = arith.constant 0 : i32
    %c0_i32_0 = arith.constant 0 : i32
    return %arg0, %c0_i32 : i32, i32
  }
  func.func @transform_1(%arg0: i32) -> (i32, i32) {
    %c0_i32 = arith.constant 0 : i32
    %c0_i32_0 = arith.constant 0 : i32
    %c0_i32_1 = arith.constant 0 : i32
    return %c0_i32, %c0_i32_0 : i32, i32
  }
  func.func @transform_2(%arg0: i32) -> (i32, i32) {
    %c0_i32 = arith.constant 0 : i32
    %c0_i32_0 = arith.constant 0 : i32
    %c0_i32_1 = arith.constant 0 : i32
    return %c0_i32, %c0_i32_0 : i32, i32
  }
  func.func @transform_3(%arg0: i32) -> (i32, i32) {
    %c0_i32 = arith.constant 0 : i32
    %c0_i32_0 = arith.constant 0 : i32
    return %arg0, %c0_i32 : i32, i32
  }
}

module attributes {stable_mosaic.version = 11 : i64} {
  func.func @kernel(%arg0: i32, %arg1: i32, %arg2: memref<128x128xbf16, #tpu.memory_space<vmem>>, %arg3: memref<128x128xbf16, #tpu.memory_space<vmem>>, %arg4: memref<128x128xf32, #tpu.memory_space<vmem>>) attributes {dimension_semantics = [#tpu.dimension_semantics<parallel>, #tpu.dimension_semantics<arbitrary>], iteration_bounds = array<i64: 1, 1>, scalar_prefetch = 0 : i64, scratch_operands = 0 : i64, tpu.core_type = #tpu.core_type<tc>, window_params = [{transform_indices = @transform_0, window_bounds = array<i64: 128, 128>}, {pipeline_mode = #tpu.pipeline_mode<synchronous>, transform_indices = @transform_1, window_bounds = array<i64: 128, 128>}, {transform_indices = @transform_2, window_bounds = array<i64: 128, 128>}]} {
    %c128_i32 = arith.constant 128 : i32
    %0 = arith.muli %arg1, %c128_i32 : i32
    %1 = tpu.assume_multiple %0, 128 : i32
    %2 = arith.index_cast %1 : i32 to index
    %c0 = arith.constant 0 : index
    %3 = vector.load %arg3[%2, %c0] : memref<128x128xbf16, #tpu.memory_space<vmem>>, vector<128x128xbf16>
    %c0_0 = arith.constant 0 : index
    %c0_1 = arith.constant 0 : index
    %4 = vector.load %arg2[%c0_0, %c0_1] : memref<128x128xbf16, #tpu.memory_space<vmem>>, vector<128x128xbf16>
    %cst = arith.constant dense<0.000000e+00> : vector<128x128xf32>
    %5 = tpu.matmul %4, %3, %cst {dimension_numbers = #tpu.dot_dimension_numbers<[1], [0], [0], [1], [0, 0, 1, 1], [], []>} : vector<128x128xbf16>, vector<128x128xbf16>, vector<128x128xf32> -> vector<128x128xf32>
    %c0_i32 = arith.constant 0 : i32
    %6 = arith.cmpi eq, %arg1, %c0_i32 : i32
    %7 = arith.extui %6 : i1 to i32
    %c0_i32_2 = arith.constant 0 : i32
    %8 = arith.cmpi ne, %7, %c0_i32_2 : i32
    scf.if %8 {
      %c0_5 = arith.constant 0 : index
      %c0_6 = arith.constant 0 : index
      %12 = vector.load %arg4[%c0_5, %c0_6] : memref<128x128xf32, #tpu.memory_space<vmem>>, vector<128x128xf32>
      tpu.vector_store %arg4[%c0_5, %c0_6], %5 {strides = array<i32>} : memref<128x128xf32, #tpu.memory_space<vmem>>, vector<128x128xf32>,
    } else {
    }
    %c0_i32_3 = arith.constant 0 : i32
    %9 = arith.cmpi sgt, %arg1, %c0_i32_3 : i32
    %10 = arith.extui %9 : i1 to i32
    %c0_i32_4 = arith.constant 0 : i32
    %11 = arith.cmpi ne, %10, %c0_i32_4 : i32
    scf.if %11 {
      %c0_5 = arith.constant 0 : index
      %c0_6 = arith.constant 0 : index
      %12 = vector.load %arg4[%c0_5, %c0_6] : memref<128x128xf32, #tpu.memory_space<vmem>>, vector<128x128xf32>
      %13 = arith.addf %12, %5 : vector<128x128xf32>
      %c0_7 = arith.constant 0 : index
      %c0_8 = arith.constant 0 : index
      %14 = vector.load %arg4[%c0_7, %c0_8] : memref<128x128xf32, #tpu.memory_space<vmem>>, vector<128x128xf32>
      tpu.vector_store %arg4[%c0_7, %c0_8], %13 {strides = array<i32>} : memref<128x128xf32, #tpu.memory_space<vmem>>, vector<128x128xf32>,
    } else {
    }
    return
  }
  func.func @transform_0(%arg0: i32, %arg1: i32) -> (i32, i32) {
    %c0_i32 = arith.constant 0 : i32
    return %arg0, %arg1 : i32, i32
  }
  func.func @transform_1(%arg0: i32, %arg1: i32) -> (i32, i32) {
    %c0_i32 = arith.constant 0 : i32
    %c0_i32_0 = arith.constant 0 : i32
    %c0_i32_1 = arith.constant 0 : i32
    return %c0_i32, %c0_i32_0 : i32, i32
  }
  func.func @transform_2(%arg0: i32, %arg1: i32) -> (i32, i32) {
    %c0_i32 = arith.constant 0 : i32
    %c0_i32_0 = arith.constant 0 : i32
    return %arg0, %c0_i32 : i32, i32
  }
}

</mosaic_0001>

<llo_original>
// kernel: mul.1
$region0: #{mul.1}
  #allocation0 [shape = 's32[1]{0}', space=sflag, size = 0x4, scoped, tag = 'scoped memory for mul.1']
  %s0 = inlined_call_operand.vmem [shape: f32[64], index: 0, kind: input, shape index: {}]
  %s1 = inlined_call_operand.vmem [shape: f32[64], index: 1, kind: input, shape index: {}]
  %s2 = inlined_call_operand.vmem [shape: f32[64], index: 2, kind: output, shape index: {}]
  %v3 = vld [vmem:[%s0] sm:$0x1]
  %v4 = vld [vmem:[%s1] sm:$0x1]
  %5 = xla_tuple %v3, %v4
  %6 = xla_tuple %5
  %v7 = vmul.f32 %v3, %v4
  %8 = xla_tuple %v7
  %9 = vst [vmem:[%s2] sm:$0x1] %v7

// kernel: vgnae_encoder_forward.2
$region0: #{vgnae_encoder_forward.2}
  #allocation0 [shape = 'u32[]', space=smem, size = 0x4, offset = 0x4, fixed_abs, tag = 'smem constant byte address 0x4 - core index']
  #allocation1 [shape = 'u32[144,128]{1,0:T(1,128)}', space=vmem, size = 0x12000, scoped, tag = 'internal scratch']
  %s0 = inlined_call_operand.vmem [shape: bf16[128,32], index: 0, kind: input, shape index: {}]
  %s1 = inlined_call_operand.vmem [shape: bf16[32,128], index: 1, kind: input, shape index: {}]
  %s2 = inlined_call_operand.vmem [shape: f32[1,128], index: 2, kind: input, shape index: {}]
  %s3 = inlined_call_operand.vmem [shape: bf16[128,128], index: 3, kind: output, shape index: {}]
  %s4 = sld [smem:[#allocation0]]
  $region22: #{vgnae_encoder_forward.2} parent=0
    _
  %s6 = ssub.s32 1, %s4
  %s7 = scalar_select 0, %s6, %s4
  // Predicated region
  $region2: #{vgnae_encoder_forward.2} parent=0 // pred_check
    _
  $region3: #{vgnae_encoder_forward.2} parent=0 // pred_check_branch
    %9 = sbr.rel (0) target = $region5
  $region4: #{vgnae_encoder_forward.2} parent=0 // pred_region
    _
  $region5: #{vgnae_encoder_forward.2} parent=0 // pred_fallthru
    _
  // Predicated region
  $region6: #{vgnae_encoder_forward.2} parent=0 // pred_check
    _
  $region7: #{vgnae_encoder_forward.2} parent=0 // pred_check_branch
    %11 = sbr.rel (0) target = $region9
  $region8: #{vgnae_encoder_forward.2} parent=0 // pred_region
    _
  $region9: #{vgnae_encoder_forward.2} parent=0 // pred_fallthru
    _
  // Predicated region
  $region10: #{vgnae_encoder_forward.2} parent=0 // pred_check
    _
  $region11: #{vgnae_encoder_forward.2} parent=0 // pred_check_branch
    %13 = sbr.rel (0) target = $region13
  $region12: #{vgnae_encoder_forward.2} parent=0 // pred_region
    _
  $region13: #{vgnae_encoder_forward.2} parent=0 // pred_fallthru
    _
  %v15 = vld [vmem:[%s0] sm:$0xf]
  %v16 = vld [vmem:[%s0 + $0x4] sm:$0xf]
  %v17 = vld [vmem:[%s0 + $0x8] sm:$0xf]
  %v18 = vld [vmem:[%s0 + $0xc] sm:$0xf]
  %v19 = vld [vmem:[%s0 + $0x10] sm:$0xf]
  %v20 = vld [vmem:[%s0 + $0x14] sm:$0xf]
  %v21 = vld [vmem:[%s0 + $0x18] sm:$0xf]
  %v22 = vld [vmem:[%s0 + $0x1c] sm:$0xf]
  %v23 = vld [vmem:[%s0 + $0x20] sm:$0xf]
  %v24 = vld [vmem:[%s0 + $0x24] sm:$0xf]
  %v25 = vld [vmem:[%s0 + $0x28] sm:$0xf]
  %v26 = vld [vmem:[%s0 + $0x2c] sm:$0xf]
  %v27 = vld [vmem:[%s0 + $0x30] sm:$0xf]
  %v28 = vld [vmem:[%s0 + $0x34] sm:$0xf]
  %v29 = vld [vmem:[%s0 + $0x38] sm:$0xf]
  %v30 = vld [vmem:[%s0 + $0x3c] sm:$0xf]
  %v31 = vld [vmem:[%s1] sm:$0xf]
  %v32 = vld [vmem:[%s1 + $0x4] sm:$0xf]
  %v33 = vld [vmem:[%s1 + $0x8] sm:$0xf]
  %v34 = vld [vmem:[%s1 + $0xc] sm:$0xf]
  %v35 = vld [vmem:[%s2] sm:$0x1]
  %v37 = vlaneseq
  %v38 = vshrl.u32 %v37, 7
  %v39 = vsub.s32 0, %v38
  %v40 = vrot.slane %v35, %v39
  %v58 = vunpack.c.l.b16 %v15
  %v59 = vunpack.c.l.b16 %v16
  %v60 = vunpack.c.l.b16 %v17
  %v61 = vunpack.c.l.b16 %v18
  %v62 = vunpack.c.l.b16 %v19
  %v63 = vunpack.c.l.b16 %v20
  %v64 = vunpack.c.l.b16 %v21
  %v65 = vunpack.c.l.b16 %v22
  %v66 = vunpack.c.l.b16 %v23
  %v67 = vunpack.c.l.b16 %v24
  %v68 = vunpack.c.l.b16 %v25
  %v69 = vunpack.c.l.b16 %v26
  %v70 = vunpack.c.l.b16 %v27
  %v71 = vunpack.c.l.b16 %v28
  %v72 = vunpack.c.l.b16 %v29
  %v73 = vunpack.c.l.b16 %v30
  %v74 = vpack.c.b16 %v59, %v58
  %v75 = vpack.c.b16 %v61, %v60
  %v76 = vpack.c.b16 %v63, %v62
  %v77 = vpack.c.b16 %v65, %v64
  %v78 = vpack.c.b16 %v67, %v66
  %v79 = vpack.c.b16 %v69, %v68
  %v80 = vpack.c.b16 %v71, %v70
  %v81 = vpack.c.b16 %v73, %v72
  %v86 = vunpack.c.l.b16 %v31
  %v87 = vunpack.c.l.b16 %v32
  %v88 = vunpack.c.l.b16 %v33
  %v89 = vunpack.c.l.b16 %v34
  %v90 = vpack.c.b16 %v87, %v86
  %v91 = vpack.c.b16 %v89, %v88
  %vm94 = vcmask 261120
  %v96 = vsel %vm94, %v74, 0
  %v99 = vsel %vm94, %v75, 0
  %v102 = vsel %vm94, %v76, 0
  %v105 = vsel %vm94, %v77, 0
  %v108 = vsel %vm94, %v78, 0
  %v111 = vsel %vm94, %v79, 0
  %v114 = vsel %vm94, %v80, 0
  %v117 = vsel %vm94, %v81, 0
  %119 = vmatprep.subr.bf16.mxu0 0
  %120 = vmatpush1.bf16.msra.mxu0 0
  %121 = vmatprep.subr.bf16.mxu0 0
  %122 = vmatpush1.bf16.msra.mxu0 0
  %123 = vmatprep.subr.bf16.mxu0 0
  %124 = vmatpush1.bf16.msra.mxu0 0
  %125 = vmatprep.subr.bf16.mxu0 0
  %126 = vmatpush1.bf16.msra.mxu0 0
  %127 = vmatprep.subr.bf16.mxu0 0
  %128 = vmatpush1.bf16.msra.mxu0 0
  %129 = vmatprep.subr.bf16.mxu0 0
  %130 = vmatpush1.bf16.msra.mxu0 0
  %131 = vmatprep.subr.bf16.mxu0 0
  %132 = vmatpush1.bf16.msra.mxu0 %v91
  %133 = vmatprep.subr.bf16.mxu0 0
  %134 = vmatpush1.bf16.msra.mxu0 %v90
  %135 = vmatprep.subr.bf16.mxu0 0
  %136 = vmatpush2.bf16.msra.mxu0 0
  %137 = vmatprep.subr.bf16.mxu0 0
  %138 = vmatpush2.bf16.msra.mxu0 0
  %139 = vmatprep.subr.bf16.mxu0 0
  %140 = vmatpush2.bf16.msra.mxu0 0
  %141 = vmatprep.subr.bf16.mxu0 0
  %142 = vmatpush2.bf16.msra.mxu0 0
  %143 = vmatprep.subr.bf16.mxu0 0
  %144 = vmatpush2.bf16.msra.mxu0 0
  %145 = vmatprep.subr.bf16.mxu0 0
  %146 = vmatpush2.bf16.msra.mxu0 0
  %147 = vmatprep.subr.bf16.mxu0 0
  %148 = vmatpush2.bf16.msra.mxu0 0
  %149 = vmatprep.subr.bf16.mxu0 0
  %150 = vmatpush2.bf16.msra.mxu0 0
  %151 = vmatprep.mubr.bf16.mxu0 0
  %152 = vmatmul.mubr.bf16.gmra.mxu0 %v96
  %v153 = vpop.f32.mrf.mxu0
  %v154 = vadd.f32 %v40, %v153
  %v155 = vpop.f32.mrf.mxu0
  %v156 = vpop.f32.mrf.mxu0
  %v157 = vadd.f32 %v40, %v156
  %v158 = vpop.f32.mrf.mxu0
  %159 = vmatprep.mubr.bf16.mxu0 0
  %160 = vmatmul.mubr.bf16.gmra.mxu0 %v99
  %v161 = vpop.f32.mrf.mxu0
  %v162 = vadd.f32 %v40, %v161
  %v163 = vpop.f32.mrf.mxu0
  %v164 = vpop.f32.mrf.mxu0
  %v165 = vadd.f32 %v40, %v164
  %v166 = vpop.f32.mrf.mxu0
  %167 = vmatprep.mubr.bf16.mxu0 0
  %168 = vmatmul.mubr.bf16.gmra.mxu0 %v102
  %v169 = vpop.f32.mrf.mxu0
  %v170 = vadd.f32 %v40, %v169
  %v171 = vpop.f32.mrf.mxu0
  %v172 = vpop.f32.mrf.mxu0
  %v173 = vadd.f32 %v40, %v172
  %v174 = vpop.f32.mrf.mxu0
  %175 = vmatprep.mubr.bf16.mxu0 0
  %176 = vmatmul.mubr.bf16.gmra.mxu0 %v105
  %v177 = vpop.f32.mrf.mxu0
  %v178 = vadd.f32 %v40, %v177
  %v179 = vpop.f32.mrf.mxu0
  %v180 = vpop.f32.mrf.mxu0
  %v181 = vadd.f32 %v40, %v180
  %v182 = vpop.f32.mrf.mxu0
  %183 = vmatprep.mubr.bf16.mxu0 0
  %184 = vmatmul.mubr.bf16.gmra.mxu0 %v108
  %v185 = vpop.f32.mrf.mxu0
  %v186 = vadd.f32 %v40, %v185
  %v187 = vpop.f32.mrf.mxu0
  %v188 = vpop.f32.mrf.mxu0
  %v189 = vadd.f32 %v40, %v188
  %v190 = vpop.f32.mrf.mxu0
  %191 = vmatprep.mubr.bf16.mxu0 0
  %192 = vmatmul.mubr.bf16.gmra.mxu0 %v111
  %v193 = vpop.f32.mrf.mxu0
  %v194 = vadd.f32 %v40, %v193
  %v195 = vpop.f32.mrf.mxu0
  %v196 = vpop.f32.mrf.mxu0
  %v197 = vadd.f32 %v40, %v196
  %v198 = vpop.f32.mrf.mxu0
  %199 = vmatprep.mubr.bf16.mxu0 0
  %200 = vmatmul.mubr.bf16.gmra.mxu0 %v114
  %v201 = vpop.f32.mrf.mxu0
  %v202 = vadd.f32 %v40, %v201
  %v203 = vpop.f32.mrf.mxu0
  %v204 = vpop.f32.mrf.mxu0
  %v205 = vadd.f32 %v40, %v204
  %v206 = vpop.f32.mrf.mxu0
  %207 = vmatprep.mubr.bf16.mxu0 0
  %208 = vmatmul.mubr.bf16.gmra.mxu0 %v117
  %v209 = vpop.f32.mrf.mxu0
  %v210 = vadd.f32 %v40, %v209
  %v211 = vpop.f32.mrf.mxu0
  %v212 = vpop.f32.mrf.mxu0
  %v213 = vadd.f32 %v40, %v212
  %v214 = vpop.f32.mrf.mxu0
  %215 = vdwg.mxu0
  %v216 = vlaneseq
  %v217 = vand.u32 %v216, 127
  %vm218 = vcmp.ge.s32.totalorder %v217, 16
  %vm219 = vcmp.lt.s32.totalorder %v217, 32
  %vm220 = vmand %vm218, %vm219
  %v221 = vsel %vm220, %v154, 0.0
  %v222 = vsel %vm220, %v157, 0.0
  %v223 = vsel %vm220, %v162, 0.0
  %v224 = vsel %vm220, %v165, 0.0
  %v225 = vsel %vm220, %v170, 0.0
  %v226 = vsel %vm220, %v173, 0.0
  %v227 = vsel %vm220, %v178, 0.0
  %v228 = vsel %vm220, %v181, 0.0
  %v229 = vsel %vm220, %v186, 0.0
  %v230 = vsel %vm220, %v189, 0.0
  %v231 = vsel %vm220, %v194, 0.0
  %v232 = vsel %vm220, %v197, 0.0
  %v233 = vsel %vm220, %v202, 0.0
  %v234 = vsel %vm220, %v205, 0.0
  %v235 = vsel %vm220, %v210, 0.0
  %v236 = vsel %vm220, %v213, 0.0
  %v237 = vmul.f32 %v221, %v221
  %v238 = vmul.f32 %v222, %v222
  %v239 = vmul.f32 %v223, %v223
  %v240 = vmul.f32 %v224, %v224
  %v241 = vmul.f32 %v225, %v225
  %v242 = vmul.f32 %v226, %v226
  %v243 = vmul.f32 %v227, %v227
  %v244 = vmul.f32 %v228, %v228
  %v245 = vmul.f32 %v229, %v229
  %v246 = vmul.f32 %v230, %v230
  %v247 = vmul.f32 %v231, %v231
  %v248 = vmul.f32 %v232, %v232
  %v249 = vmul.f32 %v233, %v233
  %v250 = vmul.f32 %v234, %v234
  %v251 = vmul.f32 %v235, %v235
  %v252 = vmul.f32 %v236, %v236
  %253 = vadd.xlane.f32.xlu0 %v237
  %v254 = vpop.xlane.xlu0 %253
  %255 = vadd.xlane.f32.xlu0 %v238
  %v256 = vpop.xlane.xlu0 %255
  %257 = vadd.xlane.f32.xlu0 %v239
  %v258 = vpop.xlane.xlu0 %257
  %259 = vadd.xlane.f32.xlu0 %v240
  %v260 = vpop.xlane.xlu0 %259
  %261 = vadd.xlane.f32.xlu0 %v241
  %v262 = vpop.xlane.xlu0 %261
  %263 = vadd.xlane.f32.xlu0 %v242
  %v264 = vpop.xlane.xlu0 %263
  %265 = vadd.xlane.f32.xlu0 %v243
  %v266 = vpop.xlane.xlu0 %265
  %267 = vadd.xlane.f32.xlu0 %v244
  %v268 = vpop.xlane.xlu0 %267
  %269 = vadd.xlane.f32.xlu0 %v245
  %v270 = vpop.xlane.xlu0 %269
  %271 = vadd.xlane.f32.xlu0 %v246
  %v272 = vpop.xlane.xlu0 %271
  %273 = vadd.xlane.f32.xlu0 %v247
  %v274 = vpop.xlane.xlu0 %273
  %275 = vadd.xlane.f32.xlu0 %v248
  %v276 = vpop.xlane.xlu0 %275
  %277 = vadd.xlane.f32.xlu0 %v249
  %v278 = vpop.xlane.xlu0 %277
  %279 = vadd.xlane.f32.xlu0 %v250
  %v280 = vpop.xlane.xlu0 %279
  %281 = vadd.xlane.f32.xlu0 %v251
  %v282 = vpop.xlane.xlu0 %281
  %283 = vadd.xlane.f32.xlu0 %v252
  %v284 = vpop.xlane.xlu0 %283
  %v285 = vmax.f32 %v254, 1e-24
  %v286 = vmax.f32 %v256, 1e-24
  %v287 = vmax.f32 %v258, 1e-24
  %v288 = vmax.f32 %v260, 1e-24
  %v289 = vmax.f32 %v262, 1e-24
  %v290 = vmax.f32 %v264, 1e-24
  %v291 = vmax.f32 %v266, 1e-24
  %v292 = vmax.f32 %v268, 1e-24
  %v293 = vmax.f32 %v270, 1e-24
  %v294 = vmax.f32 %v272, 1e-24
  %v295 = vmax.f32 %v274, 1e-24
  %v296 = vmax.f32 %v276, 1e-24
  %v297 = vmax.f32 %v278, 1e-24
  %v298 = vmax.f32 %v280, 1e-24
  %v299 = vmax.f32 %v282, 1e-24
  %v300 = vmax.f32 %v284, 1e-24
  %v301 = vrsqrt.pop %v285
  %v302 = vrsqrt.pop %v286
  %v303 = vrsqrt.pop %v287
  %v304 = vrsqrt.pop %v288
  %v305 = vrsqrt.pop %v289
  %v306 = vrsqrt.pop %v290
  %v307 = vrsqrt.pop %v291
  %v308 = vrsqrt.pop %v292
  %v309 = vrsqrt.pop %v293
  %v310 = vrsqrt.pop %v294
  %v311 = vrsqrt.pop %v295
  %v312 = vrsqrt.pop %v296
  %v313 = vrsqrt.pop %v297
  %v314 = vrsqrt.pop %v298
  %v315 = vrsqrt.pop %v299
  %v316 = vrsqrt.pop %v300
  %v317 = vmul.f32 %v301, 0.4
  %v318 = vmul.f32 %v302, 0.4
  %v319 = vmul.f32 %v303, 0.4
  %v320 = vmul.f32 %v304, 0.4
  %v321 = vmul.f32 %v305, 0.4
  %v322 = vmul.f32 %v306, 0.4
  %v323 = vmul.f32 %v307, 0.4
  %v324 = vmul.f32 %v308, 0.4
  %v325 = vmul.f32 %v309, 0.4
  %v326 = vmul.f32 %v310, 0.4
  %v327 = vmul.f32 %v311, 0.4
  %v328 = vmul.f32 %v312, 0.4
  %v329 = vmul.f32 %v313, 0.4
  %v330 = vmul.f32 %v314, 0.4
  %v331 = vmul.f32 %v315, 0.4
  %v332 = vmul.f32 %v316, 0.4
  %v333 = vmul.f32 %v154, %v317
  %v334 = vmul.f32 %v157, %v318
  %v335 = vmul.f32 %v162, %v319
  %v336 = vmul.f32 %v165, %v320
  %v337 = vmul.f32 %v170, %v321
  %v338 = vmul.f32 %v173, %v322
  %v339 = vmul.f32 %v178, %v323
  %v340 = vmul.f32 %v181, %v324
  %v341 = vmul.f32 %v186, %v325
  %v342 = vmul.f32 %v189, %v326
  %v343 = vmul.f32 %v194, %v327
  %v344 = vmul.f32 %v197, %v328
  %v345 = vmul.f32 %v202, %v329
  %v346 = vmul.f32 %v205, %v330
  %v347 = vmul.f32 %v210, %v331
  %v348 = vmul.f32 %v213, %v332
  %v349 = vsel %vm220, %v333, %v154
  %v350 = vsel %vm220, %v334, %v157
  %v351 = vsel %vm220, %v335, %v162
  %v352 = vsel %vm220, %v336, %v165
  %v353 = vsel %vm220, %v337, %v170
  %v354 = vsel %vm220, %v338, %v173
  %v355 = vsel %vm220, %v339, %v178
  %v356 = vsel %vm220, %v340, %v181
  %v357 = vsel %vm220, %v341, %v186
  %v358 = vsel %vm220, %v342, %v189
  %v359 = vsel %vm220, %v343, %v194
  %v360 = vsel %vm220, %v344, %v197
  %v361 = vsel %vm220, %v345, %v202
  %v362 = vsel %vm220, %v346, %v205
  %v363 = vsel %vm220, %v347, %v210
  %v364 = vsel %vm220, %v348, %v213
  %v365 = vpack.c.bf16 %v350, %v349
  %v366 = vpack.c.bf16 %v352, %v351
  %v367 = vpack.c.bf16 %v354, %v353
  %v368 = vpack.c.bf16 %v356, %v355
  %v369 = vpack.c.bf16 %v358, %v357
  %v370 = vpack.c.bf16 %v360, %v359
  %v371 = vpack.c.bf16 %v362, %v361
  %v372 = vpack.c.bf16 %v364, %v363
  %v381 = vunpack.c.l.b16 %v365
  %v382 = vunpack.c.h.b16 %v365
  %v383 = vunpack.c.l.b16 %v366
  %v384 = vunpack.c.h.b16 %v366
  %v385 = vunpack.c.l.b16 %v367
  %v386 = vunpack.c.h.b16 %v367
  %v387 = vunpack.c.l.b16 %v368
  %v388 = vunpack.c.h.b16 %v368
  %v389 = vunpack.c.l.b16 %v369
  %v390 = vunpack.c.h.b16 %v369
  %v391 = vunpack.c.l.b16 %v370
  %v392 = vunpack.c.h.b16 %v370
  %v393 = vunpack.c.l.b16 %v371
  %v394 = vunpack.c.h.b16 %v371
  %v395 = vunpack.c.l.b16 %v372
  %v396 = vunpack.c.h.b16 %v372
  %v397 = vpack.c.b16 %v381, %v381
  %v398 = vpack.c.b16 %v382, %v382
  %v399 = vpack.c.b16 %v383, %v383
  %v400 = vpack.c.b16 %v384, %v384
  %v401 = vpack.c.b16 %v385, %v385
  %v402 = vpack.c.b16 %v386, %v386
  %v403 = vpack.c.b16 %v387, %v387
  %v404 = vpack.c.b16 %v388, %v388
  %v405 = vpack.c.b16 %v389, %v389
  %v406 = vpack.c.b16 %v390, %v390
  %v407 = vpack.c.b16 %v391, %v391
  %v408 = vpack.c.b16 %v392, %v392
  %v409 = vpack.c.b16 %v393, %v393
  %v410 = vpack.c.b16 %v394, %v394
  %v411 = vpack.c.b16 %v395, %v395
  %v412 = vpack.c.b16 %v396, %v396
  %429 = vst [vmem:[%s3] sm:$0xf] %v397
  %430 = vst [vmem:[%s3 + $0x4] sm:$0xf] %v398
  %431 = vst [vmem:[%s3 + $0x8] sm:$0xf] %v399
  %432 = vst [vmem:[%s3 + $0xc] sm:$0xf] %v400
  %433 = vst [vmem:[%s3 + $0x10] sm:$0xf] %v401
  %434 = vst [vmem:[%s3 + $0x14] sm:$0xf] %v402
  %435 = vst [vmem:[%s3 + $0x18] sm:$0xf] %v403
  %436 = vst [vmem:[%s3 + $0x1c] sm:$0xf] %v404
  %437 = vst [vmem:[%s3 + $0x20] sm:$0xf] %v405
  %438 = vst [vmem:[%s3 + $0x24] sm:$0xf] %v406
  %439 = vst [vmem:[%s3 + $0x28] sm:$0xf] %v407
  %440 = vst [vmem:[%s3 + $0x2c] sm:$0xf] %v408
  %441 = vst [vmem:[%s3 + $0x30] sm:$0xf] %v409
  %442 = vst [vmem:[%s3 + $0x34] sm:$0xf] %v410
  %443 = vst [vmem:[%s3 + $0x38] sm:$0xf] %v411
  %444 = vst [vmem:[%s3 + $0x3c] sm:$0xf] %v412
  // Predicated region
  $region14: #{vgnae_encoder_forward.2} parent=0 // pred_check
    _
  $region15: #{vgnae_encoder_forward.2} parent=0 // pred_check_branch
    %446 = sbr.rel (0) target = $region17
  $region16: #{vgnae_encoder_forward.2} parent=0 // pred_region
    _
  $region17: #{vgnae_encoder_forward.2} parent=0 // pred_fallthru
    _
  // Predicated region
  $region18: #{vgnae_encoder_forward.2} parent=0 // pred_check
    _
  $region19: #{vgnae_encoder_forward.2} parent=0 // pred_check_branch
    %448 = sbr.rel (0) target = $region21
  $region20: #{vgnae_encoder_forward.2} parent=0 // pred_region
    _
  $region21: #{vgnae_encoder_forward.2} parent=0 // pred_fallthru
    _

// kernel: vgnae_encoder_forward.3
$region0: #{vgnae_encoder_forward.3}
  #allocation0 [shape = 'u32[]', space=smem, size = 0x4, offset = 0x4, fixed_abs, tag = 'smem constant byte address 0x4 - core index']
  #allocation1 [shape = 'u32[144,128]{1,0:T(1,128)}', space=vmem, size = 0x12000, scoped, tag = 'internal scratch']
  %s0 = inlined_call_operand.vmem [shape: bf16[128,128], index: 0, kind: input, shape index: {}]
  %s1 = inlined_call_operand.vmem [shape: bf16[128,128], index: 1, kind: input, shape index: {}]
  %s2 = inlined_call_operand.vmem [shape: f32[128,128], index: 2, kind: output, shape index: {}]
  %s3 = sld [smem:[#allocation0]]
  $region26: #{vgnae_encoder_forward.3} parent=0
    _
  %s5 = ssub.s32 1, %s3
  %s6 = scalar_select 0, %s5, %s3
  // Predicated region
  $region2: #{vgnae_encoder_forward.3} parent=0 // pred_check
    _
  $region3: #{vgnae_encoder_forward.3} parent=0 // pred_check_branch
    %8 = sbr.rel (0) target = $region5
  $region4: #{vgnae_encoder_forward.3} parent=0 // pred_region
    _
  $region5: #{vgnae_encoder_forward.3} parent=0 // pred_fallthru
    _
  // Predicated region
  $region6: #{vgnae_encoder_forward.3} parent=0 // pred_check
    _
  $region7: #{vgnae_encoder_forward.3} parent=0 // pred_check_branch
    %10 = sbr.rel (0) target = $region9
  $region8: #{vgnae_encoder_forward.3} parent=0 // pred_region
    _
  $region9: #{vgnae_encoder_forward.3} parent=0 // pred_fallthru
    _
  %s12 = smul.u32 0, 128
  %s13 = sshra.s32 %s12, 3
  %s14 = sand.u32 %s12, 7
  %s15 = smul.addr %s13, 4
  %s16 = scalar_lea.vmem %s1, %s15
  %v17 = vld [vmem:[%s16] sm:$0xf]
  %v18 = vld [vmem:[%s16 + $0x4] sm:$0xf]
  %v19 = vld [vmem:[%s16 + $0x8] sm:$0xf]
  %v20 = vld [vmem:[%s16 + $0xc] sm:$0xf]
  %v21 = vld [vmem:[%s16 + $0x10] sm:$0xf]
  %v22 = vld [vmem:[%s16 + $0x14] sm:$0xf]
  %v23 = vld [vmem:[%s16 + $0x18] sm:$0xf]
  %v24 = vld [vmem:[%s16 + $0x1c] sm:$0xf]
  %v25 = vld [vmem:[%s16 + $0x20] sm:$0xf]
  %v26 = vld [vmem:[%s16 + $0x24] sm:$0xf]
  %v27 = vld [vmem:[%s16 + $0x28] sm:$0xf]
  %v28 = vld [vmem:[%s16 + $0x2c] sm:$0xf]
  %v29 = vld [vmem:[%s16 + $0x30] sm:$0xf]
  %v30 = vld [vmem:[%s16 + $0x34] sm:$0xf]
  %v31 = vld [vmem:[%s16 + $0x38] sm:$0xf]
  %v32 = vld [vmem:[%s16 + $0x3c] sm:$0xf]
  %v33 = vld [vmem:[%s0] sm:$0xf]
  %v34 = vld [vmem:[%s0 + $0x4] sm:$0xf]
  %v35 = vld [vmem:[%s0 + $0x8] sm:$0xf]
  %v36 = vld [vmem:[%s0 + $0xc] sm:$0xf]
  %v37 = vld [vmem:[%s0 + $0x10] sm:$0xf]
  %v38 = vld [vmem:[%s0 + $0x14] sm:$0xf]
  %v39 = vld [vmem:[%s0 + $0x18] sm:$0xf]
  %v40 = vld [vmem:[%s0 + $0x1c] sm:$0xf]
  %v41 = vld [vmem:[%s0 + $0x20] sm:$0xf]
  %v42 = vld [vmem:[%s0 + $0x24] sm:$0xf]
  %v43 = vld [vmem:[%s0 + $0x28] sm:$0xf]
  %v44 = vld [vmem:[%s0 + $0x2c] sm:$0xf]
  %v45 = vld [vmem:[%s0 + $0x30] sm:$0xf]
  %v46 = vld [vmem:[%s0 + $0x34] sm:$0xf]
  %v47 = vld [vmem:[%s0 + $0x38] sm:$0xf]
  %v48 = vld [vmem:[%s0 + $0x3c] sm:$0xf]
  %v65 = vunpack.c.l.b16 %v33
  %v66 = vunpack.c.l.b16 %v34
  %v67 = vunpack.c.l.b16 %v35
  %v68 = vunpack.c.l.b16 %v36
  %v69 = vunpack.c.l.b16 %v37
  %v70 = vunpack.c.l.b16 %v38
  %v71 = vunpack.c.l.b16 %v39
  %v72 = vunpack.c.l.b16 %v40
  %v73 = vunpack.c.l.b16 %v41
  %v74 = vunpack.c.l.b16 %v42
  %v75 = vunpack.c.l.b16 %v43
  %v76 = vunpack.c.l.b16 %v44
  %v77 = vunpack.c.l.b16 %v45
  %v78 = vunpack.c.l.b16 %v46
  %v79 = vunpack.c.l.b16 %v47
  %v80 = vunpack.c.l.b16 %v48
  %v81 = vpack.c.b16 %v66, %v65
  %v82 = vpack.c.b16 %v68, %v67
  %v83 = vpack.c.b16 %v70, %v69
  %v84 = vpack.c.b16 %v72, %v71
  %v85 = vpack.c.b16 %v74, %v73
  %v86 = vpack.c.b16 %v76, %v75
  %v87 = vpack.c.b16 %v78, %v77
  %v88 = vpack.c.b16 %v80, %v79
  %v113 = vunpack.c.l.b16 %v17
  %v114 = vunpack.c.l.b16 %v18
  %v115 = vunpack.c.l.b16 %v19
  %v116 = vunpack.c.l.b16 %v20
  %v117 = vunpack.c.l.b16 %v21
  %v118 = vunpack.c.l.b16 %v22
  %v119 = vunpack.c.l.b16 %v23
  %v120 = vunpack.c.l.b16 %v24
  %v121 = vunpack.c.l.b16 %v25
  %v122 = vunpack.c.l.b16 %v26
  %v123 = vunpack.c.l.b16 %v27
  %v124 = vunpack.c.l.b16 %v28
  %v125 = vunpack.c.l.b16 %v29
  %v126 = vunpack.c.l.b16 %v30
  %v127 = vunpack.c.l.b16 %v31
  %v128 = vunpack.c.l.b16 %v32
  %v129 = vpack.c.b16 %v114, %v113
  %v130 = vpack.c.b16 %v116, %v115
  %v131 = vpack.c.b16 %v118, %v117
  %v132 = vpack.c.b16 %v120, %v119
  %v133 = vpack.c.b16 %v122, %v121
  %v134 = vpack.c.b16 %v124, %v123
  %v135 = vpack.c.b16 %v126, %v125
  %v136 = vpack.c.b16 %v128, %v127
  %145 = vmatprep.subr.bf16.mxu0 0
  %146 = vmatpush1.bf16.msra.mxu0 %v136
  %147 = vmatprep.subr.bf16.mxu0 0
  %148 = vmatpush1.bf16.msra.mxu0 %v135
  %149 = vmatprep.subr.bf16.mxu0 0
  %150 = vmatpush1.bf16.msra.mxu0 %v134
  %151 = vmatprep.subr.bf16.mxu0 0
  %152 = vmatpush1.bf16.msra.mxu0 %v133
  %153 = vmatprep.subr.bf16.mxu0 0
  %154 = vmatpush1.bf16.msra.mxu0 %v132
  %155 = vmatprep.subr.bf16.mxu0 0
  %156 = vmatpush1.bf16.msra.mxu0 %v131
  %157 = vmatprep.subr.bf16.mxu0 0
  %158 = vmatpush1.bf16.msra.mxu0 %v130
  %159 = vmatprep.subr.bf16.mxu0 0
  %160 = vmatpush1.bf16.msra.mxu0 %v129
  %161 = vmatprep.subr.bf16.mxu0 0
  %162 = vmatpush2.bf16.msra.mxu0 0
  %163 = vmatprep.subr.bf16.mxu0 0
  %164 = vmatpush2.bf16.msra.mxu0 0
  %165 = vmatprep.subr.bf16.mxu0 0
  %166 = vmatpush2.bf16.msra.mxu0 0
  %167 = vmatprep.subr.bf16.mxu0 0
  %168 = vmatpush2.bf16.msra.mxu0 0
  %169 = vmatprep.subr.bf16.mxu0 0
  %170 = vmatpush2.bf16.msra.mxu0 0
  %171 = vmatprep.subr.bf16.mxu0 0
  %172 = vmatpush2.bf16.msra.mxu0 0
  %173 = vmatprep.subr.bf16.mxu0 0
  %174 = vmatpush2.bf16.msra.mxu0 0
  %175 = vmatprep.subr.bf16.mxu0 0
  %176 = vmatpush2.bf16.msra.mxu0 0
  %177 = vmatprep.mubr.bf16.mxu0 0
  %178 = vmatmul.mubr.bf16.gmra.mxu0 %v81
  %v179 = vpop.f32.mrf.mxu0
  %v180 = vadd.f32 0.0, %v179
  %v181 = vpop.f32.mrf.mxu0
  %v182 = vpop.f32.mrf.mxu0
  %v183 = vadd.f32 0.0, %v182
  %v184 = vpop.f32.mrf.mxu0
  %185 = vmatprep.mubr.bf16.mxu0 0
  %186 = vmatmul.mubr.bf16.gmra.mxu0 %v82
  %v187 = vpop.f32.mrf.mxu0
  %v188 = vadd.f32 0.0, %v187
  %v189 = vpop.f32.mrf.mxu0
  %v190 = vpop.f32.mrf.mxu0
  %v191 = vadd.f32 0.0, %v190
  %v192 = vpop.f32.mrf.mxu0
  %193 = vmatprep.mubr.bf16.mxu0 0
  %194 = vmatmul.mubr.bf16.gmra.mxu0 %v83
  %v195 = vpop.f32.mrf.mxu0
  %v196 = vadd.f32 0.0, %v195
  %v197 = vpop.f32.mrf.mxu0
  %v198 = vpop.f32.mrf.mxu0
  %v199 = vadd.f32 0.0, %v198
  %v200 = vpop.f32.mrf.mxu0
  %201 = vmatprep.mubr.bf16.mxu0 0
  %202 = vmatmul.mubr.bf16.gmra.mxu0 %v84
  %v203 = vpop.f32.mrf.mxu0
  %v204 = vadd.f32 0.0, %v203
  %v205 = vpop.f32.mrf.mxu0
  %v206 = vpop.f32.mrf.mxu0
  %v207 = vadd.f32 0.0, %v206
  %v208 = vpop.f32.mrf.mxu0
  %209 = vmatprep.mubr.bf16.mxu0 0
  %210 = vmatmul.mubr.bf16.gmra.mxu0 %v85
  %v211 = vpop.f32.mrf.mxu0
  %v212 = vadd.f32 0.0, %v211
  %v213 = vpop.f32.mrf.mxu0
  %v214 = vpop.f32.mrf.mxu0
  %v215 = vadd.f32 0.0, %v214
  %v216 = vpop.f32.mrf.mxu0
  %217 = vmatprep.mubr.bf16.mxu0 0
  %218 = vmatmul.mubr.bf16.gmra.mxu0 %v86
  %v219 = vpop.f32.mrf.mxu0
  %v220 = vadd.f32 0.0, %v219
  %v221 = vpop.f32.mrf.mxu0
  %v222 = vpop.f32.mrf.mxu0
  %v223 = vadd.f32 0.0, %v222
  %v224 = vpop.f32.mrf.mxu0
  %225 = vmatprep.mubr.bf16.mxu0 0
  %226 = vmatmul.mubr.bf16.gmra.mxu0 %v87
  %v227 = vpop.f32.mrf.mxu0
  %v228 = vadd.f32 0.0, %v227
  %v229 = vpop.f32.mrf.mxu0
  %v230 = vpop.f32.mrf.mxu0
  %v231 = vadd.f32 0.0, %v230
  %v232 = vpop.f32.mrf.mxu0
  %233 = vmatprep.mubr.bf16.mxu0 0
  %234 = vmatmul.mubr.bf16.gmra.mxu0 %v88
  %v235 = vpop.f32.mrf.mxu0
  %v236 = vadd.f32 0.0, %v235
  %v237 = vpop.f32.mrf.mxu0
  %v238 = vpop.f32.mrf.mxu0
  %v239 = vadd.f32 0.0, %v238
  %v240 = vpop.f32.mrf.mxu0
  %241 = vdwg.mxu0
  %p242 = scmp.eq.s32.totalorder 0, 0
  // Predicated region
  $region10: #{vgnae_encoder_forward.3} parent=0 // pred_check
    %p243 = pneg %p242
  $region11: #{vgnae_encoder_forward.3} parent=0 // pred_check_branch
    %245 = sbr.rel (%p243) target = $region13
  $region12: #{vgnae_encoder_forward.3} parent=0 // pred_region
    %246 = vst [vmem:[%s2] sm:$0xff] %v180
    %247 = vst [vmem:[%s2 + $0x8] sm:$0xff] %v183
    %248 = vst [vmem:[%s2 + $0x10] sm:$0xff] %v188
    %249 = vst [vmem:[%s2 + $0x18] sm:$0xff] %v191
    %250 = vst [vmem:[%s2 + $0x20] sm:$0xff] %v196
    %251 = vst [vmem:[%s2 + $0x28] sm:$0xff] %v199
    %252 = vst [vmem:[%s2 + $0x30] sm:$0xff] %v204
    %253 = vst [vmem:[%s2 + $0x38] sm:$0xff] %v207
    %254 = vst [vmem:[%s2 + $0x40] sm:$0xff] %v212
    %255 = vst [vmem:[%s2 + $0x48] sm:$0xff] %v215
    %256 = vst [vmem:[%s2 + $0x50] sm:$0xff] %v220
    %257 = vst [vmem:[%s2 + $0x58] sm:$0xff] %v223
    %258 = vst [vmem:[%s2 + $0x60] sm:$0xff] %v228
    %259 = vst [vmem:[%s2 + $0x68] sm:$0xff] %v231
    %260 = vst [vmem:[%s2 + $0x70] sm:$0xff] %v236
    %261 = vst [vmem:[%s2 + $0x78] sm:$0xff] %v239
  $region13: #{vgnae_encoder_forward.3} parent=0 // pred_fallthru
    _
  %p262 = scmp.gt.s32.totalorder 0, 0
  // Predicated region
  $region14: #{vgnae_encoder_forward.3} parent=0 // pred_check
    %p263 = pneg %p262
  $region15: #{vgnae_encoder_forward.3} parent=0 // pred_check_branch
    %265 = sbr.rel (%p263) target = $region17
  $region16: #{vgnae_encoder_forward.3} parent=0 // pred_region
    %v266 = vld [vmem:[%s2] sm:$0xff]
    %v267 = vld [vmem:[%s2 + $0x8] sm:$0xff]
    %v268 = vld [vmem:[%s2 + $0x10] sm:$0xff]
    %v269 = vld [vmem:[%s2 + $0x18] sm:$0xff]
    %v270 = vld [vmem:[%s2 + $0x20] sm:$0xff]
    %v271 = vld [vmem:[%s2 + $0x28] sm:$0xff]
    %v272 = vld [vmem:[%s2 + $0x30] sm:$0xff]
    %v273 = vld [vmem:[%s2 + $0x38] sm:$0xff]
    %v274 = vld [vmem:[%s2 + $0x40] sm:$0xff]
    %v275 = vld [vmem:[%s2 + $0x48] sm:$0xff]
    %v276 = vld [vmem:[%s2 + $0x50] sm:$0xff]
    %v277 = vld [vmem:[%s2 + $0x58] sm:$0xff]
    %v278 = vld [vmem:[%s2 + $0x60] sm:$0xff]
    %v279 = vld [vmem:[%s2 + $0x68] sm:$0xff]
    %v280 = vld [vmem:[%s2 + $0x70] sm:$0xff]
    %v281 = vld [vmem:[%s2 + $0x78] sm:$0xff]
    %v282 = vadd.f32 %v266, %v180
    %v283 = vadd.f32 %v267, %v183
    %v284 = vadd.f32 %v268, %v188
    %v285 = vadd.f32 %v269, %v191
    %v286 = vadd.f32 %v270, %v196
    %v287 = vadd.f32 %v271, %v199
    %v288 = vadd.f32 %v272, %v204
    %v289 = vadd.f32 %v273, %v207
    %v290 = vadd.f32 %v274, %v212
    %v291 = vadd.f32 %v275, %v215
    %v292 = vadd.f32 %v276, %v220
    %v293 = vadd.f32 %v277, %v223
    %v294 = vadd.f32 %v278, %v228
    %v295 = vadd.f32 %v279, %v231
    %v296 = vadd.f32 %v280, %v236
    %v297 = vadd.f32 %v281, %v239
    %298 = vst [vmem:[%s2] sm:$0xff] %v282
    %299 = vst [vmem:[%s2 + $0x8] sm:$0xff] %v283
    %300 = vst [vmem:[%s2 + $0x10] sm:$0xff] %v284
    %301 = vst [vmem:[%s2 + $0x18] sm:$0xff] %v285
    %302 = vst [vmem:[%s2 + $0x20] sm:$0xff] %v286
    %303 = vst [vmem:[%s2 + $0x28] sm:$0xff] %v287
    %304 = vst [vmem:[%s2 + $0x30] sm:$0xff] %v288
    %305 = vst [vmem:[%s2 + $0x38] sm:$0xff] %v289
    %306 = vst [vmem:[%s2 + $0x40] sm:$0xff] %v290
    %307 = vst [vmem:[%s2 + $0x48] sm:$0xff] %v291
    %308 = vst [vmem:[%s2 + $0x50] sm:$0xff] %v292
    %309 = vst [vmem:[%s2 + $0x58] sm:$0xff] %v293
    %310 = vst [vmem:[%s2 + $0x60] sm:$0xff] %v294
    %311 = vst [vmem:[%s2 + $0x68] sm:$0xff] %v295
    %312 = vst [vmem:[%s2 + $0x70] sm:$0xff] %v296
    %313 = vst [vmem:[%s2 + $0x78] sm:$0xff] %v297
  $region17: #{vgnae_encoder_forward.3} parent=0 // pred_fallthru
    _
  // Predicated region
  $region18: #{vgnae_encoder_forward.3} parent=0 // pred_check
    _
  $region19: #{vgnae_encoder_forward.3} parent=0 // pred_check_branch
    %315 = sbr.rel (0) target = $region21
  $region20: #{vgnae_encoder_forward.3} parent=0 // pred_region
    _
  $region21: #{vgnae_encoder_forward.3} parent=0 // pred_fallthru
    _
  // Predicated region
  $region22: #{vgnae_encoder_forward.3} parent=0 // pred_check
    _
  $region23: #{vgnae_encoder_forward.3} parent=0 // pred_check_branch
    %317 = sbr.rel (0) target = $region25
  $region24: #{vgnae_encoder_forward.3} parent=0 // pred_region
    _
  $region25: #{vgnae_encoder_forward.3} parent=0 // pred_fallthru
    _

</llo_original>
